<compile_context>
chip_gen: v7x
topology: tpu7x:2x2x1
jax: 0.10.0
libtpu: 0.0.40
codegen_flags: <defaults>
</compile_context>

<pallas_src>
import functools

import jax
import jax.numpy as jnp
from jax.experimental import pallas as pl
from jax.experimental.pallas import tpu as pltpu


IN_FEATURES = 28 * 28      # 784 (divisible by 8; used directly as the fc1 contraction dim)
H1 = 128                   # fc1 out (lane-aligned)
H2 = 64                    # fc2 out (logical)
H2_PAD = 128               # fc2 out (padded, lane-dense)
OUT = 10                   # fc3 out (logical)
OUT_PAD = 128              # fc3 out (padded, lane-dense)


def _mlp_kernel(x_ref, w1_ref, b1_ref, w2_ref, b2_ref, w3_ref, b3_ref, o_ref):
    # Cast the f32 activation tile to bf16 in-kernel (VPU slack) -> MXU bf16 inputs.
    x = x_ref[...].astype(jnp.bfloat16)
    # fc1 + ReLU  (bf16 x bf16 -> f32 accumulate on MXU; ragged K=784 is fine)
    h1 = jnp.dot(x, w1_ref[...], preferred_element_type=jnp.float32)
    h1 = jnp.maximum(h1 + b1_ref[...], 0.0)
    # fc2 + ReLU (padded columns 64:128 have zero weights/bias -> stay exactly 0)
    h2 = jnp.dot(h1.astype(jnp.bfloat16), w2_ref[...],
                 preferred_element_type=jnp.float32)
    h2 = jnp.maximum(h2 + b2_ref[...], 0.0)
    # fc3 (no activation); padded output columns 10:128 are zero, sliced off outside.
    out = jnp.dot(h2.astype(jnp.bfloat16), w3_ref[...],
                  preferred_element_type=jnp.float32)
    o_ref[...] = (out + b3_ref[...]).astype(o_ref.dtype)


def prepare_params(params):
    """One-time pad/cast: weights -> bf16 lane-aligned, biases -> f32 lane-aligned.

    Call once and reuse the result across forward calls (keeps per-call HBM traffic to
    the minimal resident-weight DMA and avoids re-running the zero-fill/convert ops).
    """
    w1, b1, w2, b2, w3, b3 = params
    w1p = w1.astype(jnp.bfloat16)                                  # (784, 128)
    b1p = b1.reshape(1, H1).astype(jnp.float32)                    # (1, 128)
    w2p = jnp.zeros((H1, H2_PAD), jnp.bfloat16).at[:, :H2].set(
        w2.astype(jnp.bfloat16))                                   # (128, 128)
    b2p = jnp.zeros((1, H2_PAD), jnp.float32).at[:, :H2].set(
        b2.reshape(1, H2).astype(jnp.float32))                     # (1, 128)
    w3p = jnp.zeros((H2_PAD, OUT_PAD), jnp.bfloat16).at[:H2, :OUT].set(
        w3.astype(jnp.bfloat16))                                   # (128, 128)
    b3p = jnp.zeros((1, OUT_PAD), jnp.float32).at[:, :OUT].set(
        b3.reshape(1, OUT).astype(jnp.float32))                    # (1, 128)
    return w1p, b1p, w2p, b2p, w3p, b3p


@functools.partial(jax.jit, static_argnames=("tb",))
def nikola_nn_forward(x, prepared_params, tb=None):
    """x: anything that flattens to (-1, 784). Returns (batch, 10) f32 logits.

    `prepared_params` is the output of prepare_params(params).
    """
    w1p, b1p, w2p, b2p, w3p, b3p = prepared_params

    x2d = x.reshape(-1, IN_FEATURES).astype(jnp.float32)
    batch = x2d.shape[0]

    # Batch tile: aim for 512-1024 rows (near HBM roofline), keep >= 4 grid tiles so both
    # v7x TensorCores get work, cap at 1024 so v5e's 16 MiB scoped-VMEM default is safe.
    if tb is None:
        tb = ((pl.cdiv(batch, 4) + 127) // 128) * 128   # round up to multiple of 128
        tb = max(128, min(1024, tb))

    padded_batch = pl.cdiv(batch, tb) * tb
    if padded_batch != batch:
        # Row-pad only when needed (at most tb-1 rows of zeros).
        x2d = jnp.pad(x2d, ((0, padded_batch - batch), (0, 0)))

    grid = (padded_batch // tb,)

    flops = 2 * padded_batch * (IN_FEATURES * H1 + H1 * H2_PAD + H2_PAD * OUT_PAD)
    bytes_accessed = (
        padded_batch * IN_FEATURES * 4                 # f32 activations in
        + (w1p.size + w2p.size + w3p.size) * 2         # bf16 weights (resident)
        + (b1p.size + b2p.size + b3p.size) * 4         # f32 biases
        + padded_batch * OUT_PAD * 4                   # f32 output
    )

    out_padded = pl.pallas_call(
        _mlp_kernel,
        out_shape=jax.ShapeDtypeStruct((padded_batch, OUT_PAD), jnp.float32),
        grid_spec=pltpu.PrefetchScalarGridSpec(
            num_scalar_prefetch=0,
            grid=grid,
            in_specs=[
                pl.BlockSpec((tb, IN_FEATURES), lambda i: (i, 0)),     # x tile (pipelined)
                pl.BlockSpec((IN_FEATURES, H1), lambda i: (0, 0)),     # w1 (resident)
                pl.BlockSpec((1, H1), lambda i: (0, 0)),               # b1
                pl.BlockSpec((H1, H2_PAD), lambda i: (0, 0)),          # w2
                pl.BlockSpec((1, H2_PAD), lambda i: (0, 0)),           # b2
                pl.BlockSpec((H2_PAD, OUT_PAD), lambda i: (0, 0)),     # w3
                pl.BlockSpec((1, OUT_PAD), lambda i: (0, 0)),          # b3
            ],
            out_specs=pl.BlockSpec((tb, OUT_PAD), lambda i: (i, 0)),
        ),
        compiler_params=pltpu.CompilerParams(
            dimension_semantics=("parallel",),   # v7x: split batch tiles across 2 TCs
        ),
        cost_estimate=pl.CostEstimate(
            flops=int(flops), transcendentals=0, bytes_accessed=int(bytes_accessed)),
    )(x2d, w1p, b1p, w2p, b2p, w3p, b3p)

    # Strip batch padding and padded logit columns (fused inside the same jit).
    return out_padded[:batch, :OUT]


def init_params(key):
    """Matches nn.Linear default init (U[-1/sqrt(fan_in), 1/sqrt(fan_in)]).

    Weights are stored transposed, i.e. (in_features, out_features), so the kernel
    computes x @ W with no in-kernel transpose.
    """
    def linear(key, fan_in, fan_out):
        kw, kb = jax.random.split(key)
        bound = 1.0 / jnp.sqrt(float(fan_in))
        w = jax.random.uniform(kw, (fan_in, fan_out), jnp.float32, -bound, bound)
        b = jax.random.uniform(kb, (1, fan_out), jnp.float32, -bound, bound)
        return w, b

    k1, k2, k3 = jax.random.split(key, 3)
    w1, b1 = linear(k1, IN_FEATURES, H1)
    w2, b2 = linear(k2, H1, H2)
    w3, b3 = linear(k3, H2, OUT)
    return (w1, b1, w2, b2, w3, b3)


def _reference_forward(x2d, params):
    """Pure-JAX reference mimicking the kernel's bf16-input / f32-accumulate math."""
    w1, b1, w2, b2, w3, b3 = params
    bf = lambda a: a.astype(jnp.bfloat16).astype(jnp.float32)
    h = jnp.maximum(bf(x2d) @ bf(w1) + b1, 0.0)
    h = jnp.maximum(bf(h) @ bf(w2) + b2, 0.0)
    return bf(h) @ bf(w3) + b3


if __name__ == "__main__":
    key = jax.random.PRNGKey(0)
    kx, kp = jax.random.split(key)
    params = init_params(kp)
    prepared = prepare_params(params)   # one-time pad/cast, reused across calls

    # MNIST-like input: (batch, 1, 28, 28) NCHW; forward flattens to (batch, 784).
    x = jax.random.normal(kx, (8, 1, 28, 28), dtype=jnp.float32)

    out = nikola_nn_forward(x, prepared)
    out = jax.block_until_ready(out)
    assert out.shape == (8, OUT)

    ref = _reference_forward(x.reshape(-1, IN_FEATURES).astype(jnp.float32), params)
    assert jnp.allclose(out, ref, atol=5e-3, rtol=5e-3), (
        float(jnp.max(jnp.abs(out - ref))))

    print("KERNEL_OK")
</pallas_src>

<mosaic_0001>
module attributes {stable_mosaic.version = 11 : i64} {
  func.func @_mlp_kernel(%arg0: i32, %arg1: memref<128x784xf32, #tpu.memory_space<vmem>>, %arg2: memref<784x128xbf16, #tpu.memory_space<vmem>>, %arg3: memref<1x128xf32, #tpu.memory_space<vmem>>, %arg4: memref<128x128xbf16, #tpu.memory_space<vmem>>, %arg5: memref<1x128xf32, #tpu.memory_space<vmem>>, %arg6: memref<128x128xbf16, #tpu.memory_space<vmem>>, %arg7: memref<1x128xf32, #tpu.memory_space<vmem>>, %arg8: memref<128x128xf32, #tpu.memory_space<vmem>>) attributes {dimension_semantics = [#tpu.dimension_semantics<parallel>], iteration_bounds = array<i64: 1>, scalar_prefetch = 0 : i64, scratch_operands = 0 : i64, tpu.core_type = #tpu.core_type<tc>, window_params = [{transform_indices = @transform_0, window_bounds = array<i64: 128, 784>}, {pipeline_mode = #tpu.pipeline_mode<synchronous>, transform_indices = @transform_1, window_bounds = array<i64: 784, 128>}, {pipeline_mode = #tpu.pipeline_mode<synchronous>, transform_indices = @transform_2, window_bounds = array<i64: 1, 128>}, {pipeline_mode = #tpu.pipeline_mode<synchronous>, transform_indices = @transform_3, window_bounds = array<i64: 128, 128>}, {pipeline_mode = #tpu.pipeline_mode<synchronous>, transform_indices = @transform_4, window_bounds = array<i64: 1, 128>}, {pipeline_mode = #tpu.pipeline_mode<synchronous>, transform_indices = @transform_5, window_bounds = array<i64: 128, 128>}, {pipeline_mode = #tpu.pipeline_mode<synchronous>, transform_indices = @transform_6, window_bounds = array<i64: 1, 128>}, {transform_indices = @transform_7, window_bounds = array<i64: 128, 128>}]} {
    %c0 = arith.constant 0 : index
    %c0_0 = arith.constant 0 : index
    %0 = vector.load %arg1[%c0, %c0_0] : memref<128x784xf32, #tpu.memory_space<vmem>>, vector<128x784xf32>
    %1 = arith.truncf %0 : vector<128x784xf32> to vector<128x784xbf16>
    %c0_1 = arith.constant 0 : index
    %c0_2 = arith.constant 0 : index
    %2 = vector.load %arg2[%c0_1, %c0_2] : memref<784x128xbf16, #tpu.memory_space<vmem>>, vector<784x128xbf16>
    %cst = arith.constant dense<0.000000e+00> : vector<128x128xf32>
    %3 = tpu.matmul %1, %2, %cst {dimension_numbers = #tpu.dot_dimension_numbers<[1], [0], [0], [1], [0, 0, 1, 1], [], []>} : vector<128x784xbf16>, vector<784x128xbf16>, vector<128x128xf32> -> vector<128x128xf32>
    %c0_3 = arith.constant 0 : index
    %c0_4 = arith.constant 0 : index
    %4 = vector.load %arg3[%c0_3, %c0_4] : memref<1x128xf32, #tpu.memory_space<vmem>>, vector<1x128xf32>
    %5 = vector.broadcast %4 : vector<1x128xf32> to vector<128x128xf32>
    %6 = arith.addf %3, %5 : vector<128x128xf32>
    %cst_5 = arith.constant 0.000000e+00 : f32
    %7 = vector.broadcast %cst_5 : f32 to vector<128x128xf32>
    %8 = arith.maximumf %6, %7 : vector<128x128xf32>
    %9 = arith.truncf %8 : vector<128x128xf32> to vector<128x128xbf16>
    %c0_6 = arith.constant 0 : index
    %c0_7 = arith.constant 0 : index
    %10 = vector.load %arg4[%c0_6, %c0_7] : memref<128x128xbf16, #tpu.memory_space<vmem>>, vector<128x128xbf16>
    %cst_8 = arith.constant dense<0.000000e+00> : vector<128x128xf32>
    %11 = tpu.matmul %9, %10, %cst_8 {dimension_numbers = #tpu.dot_dimension_numbers<[1], [0], [0], [1], [0, 0, 1, 1], [], []>} : vector<128x128xbf16>, vector<128x128xbf16>, vector<128x128xf32> -> vector<128x128xf32>
    %c0_9 = arith.constant 0 : index
    %c0_10 = arith.constant 0 : index
    %12 = vector.load %arg5[%c0_9, %c0_10] : memref<1x128xf32, #tpu.memory_space<vmem>>, vector<1x128xf32>
    %13 = vector.broadcast %12 : vector<1x128xf32> to vector<128x128xf32>
    %14 = arith.addf %11, %13 : vector<128x128xf32>
    %cst_11 = arith.constant 0.000000e+00 : f32
    %15 = vector.broadcast %cst_11 : f32 to vector<128x128xf32>
    %16 = arith.maximumf %14, %15 : vector<128x128xf32>
    %17 = arith.truncf %16 : vector<128x128xf32> to vector<128x128xbf16>
    %c0_12 = arith.constant 0 : index
    %c0_13 = arith.constant 0 : index
    %18 = vector.load %arg6[%c0_12, %c0_13] : memref<128x128xbf16, #tpu.memory_space<vmem>>, vector<128x128xbf16>
    %cst_14 = arith.constant dense<0.000000e+00> : vector<128x128xf32>
    %19 = tpu.matmul %17, %18, %cst_14 {dimension_numbers = #tpu.dot_dimension_numbers<[1], [0], [0], [1], [0, 0, 1, 1], [], []>} : vector<128x128xbf16>, vector<128x128xbf16>, vector<128x128xf32> -> vector<128x128xf32>
    %c0_15 = arith.constant 0 : index
    %c0_16 = arith.constant 0 : index
    %20 = vector.load %arg7[%c0_15, %c0_16] : memref<1x128xf32, #tpu.memory_space<vmem>>, vector<1x128xf32>
    %21 = vector.broadcast %20 : vector<1x128xf32> to vector<128x128xf32>
    %22 = arith.addf %19, %21 : vector<128x128xf32>
    %c0_17 = arith.constant 0 : index
    %c0_18 = arith.constant 0 : index
    %23 = vector.load %arg8[%c0_17, %c0_18] : memref<128x128xf32, #tpu.memory_space<vmem>>, vector<128x128xf32>
    tpu.vector_store %arg8[%c0_17, %c0_18], %22 {strides = array<i32>} : memref<128x128xf32, #tpu.memory_space<vmem>>, vector<128x128xf32>,
    return
  }
  func.func @transform_0(%arg0: i32) -> (i32, i32) {
    %c0_i32 = arith.constant 0 : i32
    %c0_i32_0 = arith.constant 0 : i32
    return %arg0, %c0_i32 : i32, i32
  }
  func.func @transform_1(%arg0: i32) -> (i32, i32) {
    %c0_i32 = arith.constant 0 : i32
    %c0_i32_0 = arith.constant 0 : i32
    %c0_i32_1 = arith.constant 0 : i32
    return %c0_i32, %c0_i32_0 : i32, i32
  }
  func.func @transform_2(%arg0: i32) -> (i32, i32) {
    %c0_i32 = arith.constant 0 : i32
    %c0_i32_0 = arith.constant 0 : i32
    %c0_i32_1 = arith.constant 0 : i32
    return %c0_i32, %c0_i32_0 : i32, i32
  }
  func.func @transform_3(%arg0: i32) -> (i32, i32) {
    %c0_i32 = arith.constant 0 : i32
    %c0_i32_0 = arith.constant 0 : i32
    %c0_i32_1 = arith.constant 0 : i32
    return %c0_i32, %c0_i32_0 : i32, i32
  }
  func.func @transform_4(%arg0: i32) -> (i32, i32) {
    %c0_i32 = arith.constant 0 : i32
    %c0_i32_0 = arith.constant 0 : i32
    %c0_i32_1 = arith.constant 0 : i32
    return %c0_i32, %c0_i32_0 : i32, i32
  }
  func.func @transform_5(%arg0: i32) -> (i32, i32) {
    %c0_i32 = arith.constant 0 : i32
    %c0_i32_0 = arith.constant 0 : i32
    %c0_i32_1 = arith.constant 0 : i32
    return %c0_i32, %c0_i32_0 : i32, i32
  }
  func.func @transform_6(%arg0: i32) -> (i32, i32) {
    %c0_i32 = arith.constant 0 : i32
    %c0_i32_0 = arith.constant 0 : i32
    %c0_i32_1 = arith.constant 0 : i32
    return %c0_i32, %c0_i32_0 : i32, i32
  }
  func.func @transform_7(%arg0: i32) -> (i32, i32) {
    %c0_i32 = arith.constant 0 : i32
    %c0_i32_0 = arith.constant 0 : i32
    return %arg0, %c0_i32 : i32, i32
  }
}

</mosaic_0001>

<llo_original>
// kernel: nikola_nn_forward.1
$region0: #{nikola_nn_forward.1}
  #allocation0 [shape = 'u32[]', space=smem, size = 0x4, offset = 0x4, fixed_abs, tag = 'smem constant byte address 0x4 - core index']
  #allocation1 [shape = 'u32[144,128]{1,0:T(1,128)}', space=vmem, size = 0x12000, scoped, tag = 'internal scratch']
  %s0 = inlined_call_operand.vmem [shape: f32[128,784], index: 0, kind: input, shape index: {}]
  %s1 = inlined_call_operand.vmem [shape: bf16[784,128], index: 1, kind: input, shape index: {}]
  %s2 = inlined_call_operand.vmem [shape: f32[1,128], index: 2, kind: input, shape index: {}]
  %s3 = inlined_call_operand.vmem [shape: bf16[128,128], index: 3, kind: input, shape index: {}]
  %s4 = inlined_call_operand.vmem [shape: f32[1,128], index: 4, kind: input, shape index: {}]
  %s5 = inlined_call_operand.vmem [shape: bf16[128,128], index: 5, kind: input, shape index: {}]
  %s6 = inlined_call_operand.vmem [shape: f32[1,128], index: 6, kind: input, shape index: {}]
  %s7 = inlined_call_operand.vmem [shape: f32[128,128], index: 7, kind: output, shape index: {}]
  %s8 = sld [smem:[#allocation0]]
  $region38: #{nikola_nn_forward.1} parent=0
    _
  %s10 = ssub.s32 1, %s8
  %s11 = scalar_select 0, %s10, %s8
  // Predicated region
  $region2: #{nikola_nn_forward.1} parent=0 // pred_check
    _
  $region3: #{nikola_nn_forward.1} parent=0 // pred_check_branch
    %13 = sbr.rel (0) target = $region5
  $region4: #{nikola_nn_forward.1} parent=0 // pred_region
    _
  $region5: #{nikola_nn_forward.1} parent=0 // pred_fallthru
    _
  // Predicated region
  $region6: #{nikola_nn_forward.1} parent=0 // pred_check
    _
  $region7: #{nikola_nn_forward.1} parent=0 // pred_check_branch
    %15 = sbr.rel (0) target = $region9
  $region8: #{nikola_nn_forward.1} parent=0 // pred_region
    _
  $region9: #{nikola_nn_forward.1} parent=0 // pred_fallthru
    _
  // Predicated region
  $region10: #{nikola_nn_forward.1} parent=0 // pred_check
    _
  $region11: #{nikola_nn_forward.1} parent=0 // pred_check_branch
    %17 = sbr.rel (0) target = $region13
  $region12: #{nikola_nn_forward.1} parent=0 // pred_region
    _
  $region13: #{nikola_nn_forward.1} parent=0 // pred_fallthru
    _
  // Predicated region
  $region14: #{nikola_nn_forward.1} parent=0 // pred_check
    _
  $region15: #{nikola_nn_forward.1} parent=0 // pred_check_branch
    %19 = sbr.rel (0) target = $region17
  $region16: #{nikola_nn_forward.1} parent=0 // pred_region
    _
  $region17: #{nikola_nn_forward.1} parent=0 // pred_fallthru
    _
  // Predicated region
  $region18: #{nikola_nn_forward.1} parent=0 // pred_check
    _
  $region19: #{nikola_nn_forward.1} parent=0 // pred_check_branch
    %21 = sbr.rel (0) target = $region21
  $region20: #{nikola_nn_forward.1} parent=0 // pred_region
    _
  $region21: #{nikola_nn_forward.1} parent=0 // pred_fallthru
    _
  // Predicated region
  $region22: #{nikola_nn_forward.1} parent=0 // pred_check
    _
  $region23: #{nikola_nn_forward.1} parent=0 // pred_check_branch
    %23 = sbr.rel (0) target = $region25
  $region24: #{nikola_nn_forward.1} parent=0 // pred_region
    _
  $region25: #{nikola_nn_forward.1} parent=0 // pred_fallthru
    _
  // Predicated region
  $region26: #{nikola_nn_forward.1} parent=0 // pred_check
    _
  $region27: #{nikola_nn_forward.1} parent=0 // pred_check_branch
    %25 = sbr.rel (0) target = $region29
  $region28: #{nikola_nn_forward.1} parent=0 // pred_region
    _
  $region29: #{nikola_nn_forward.1} parent=0 // pred_fallthru
    _
  %v27 = vld [vmem:[%s0] sm:$0xff]
  %v28 = vld [vmem:[%s0 + $0x8] sm:$0xff]
  %v29 = vld [vmem:[%s0 + $0x10] sm:$0xff]
  %v30 = vld [vmem:[%s0 + $0x18] sm:$0xff]
  %v31 = vld [vmem:[%s0 + $0x20] sm:$0xff]
  %v32 = vld [vmem:[%s0 + $0x28] sm:$0xff]
  %v33 = vld [vmem:[%s0 + $0x30] sm:$0xff]
  %v34 = vld [vmem:[%s0 + $0x38] sm:$0xff]
  %v35 = vld [vmem:[%s0 + $0x40] sm:$0xff]
  %v36 = vld [vmem:[%s0 + $0x48] sm:$0xff]
  %v37 = vld [vmem:[%s0 + $0x50] sm:$0xff]
  %v38 = vld [vmem:[%s0 + $0x58] sm:$0xff]
  %v39 = vld [vmem:[%s0 + $0x60] sm:$0xff]
  %v40 = vld [vmem:[%s0 + $0x68] sm:$0xff]
  %v41 = vld [vmem:[%s0 + $0x70] sm:$0xff]
  %v42 = vld [vmem:[%s0 + $0x78] sm:$0xff]
  %v43 = vld [vmem:[%s0 + $0x80] sm:$0xff]
  %v44 = vld [vmem:[%s0 + $0x88] sm:$0xff]
  %v45 = vld [vmem:[%s0 + $0x90] sm:$0xff]
  %v46 = vld [vmem:[%s0 + $0x98] sm:$0xff]
  %v47 = vld [vmem:[%s0 + $0xa0] sm:$0xff]
  %v48 = vld [vmem:[%s0 + $0xa8] sm:$0xff]
  %v49 = vld [vmem:[%s0 + $0xb0] sm:$0xff]
  %v50 = vld [vmem:[%s0 + $0xb8] sm:$0xff]
  %v51 = vld [vmem:[%s0 + $0xc0] sm:$0xff]
  %v52 = vld [vmem:[%s0 + $0xc8] sm:$0xff]
  %v53 = vld [vmem:[%s0 + $0xd0] sm:$0xff]
  %v54 = vld [vmem:[%s0 + $0xd8] sm:$0xff]
  %v55 = vld [vmem:[%s0 + $0xe0] sm:$0xff]
  %v56 = vld [vmem:[%s0 + $0xe8] sm:$0xff]
  %v57 = vld [vmem:[%s0 + $0xf0] sm:$0xff]
  %v58 = vld [vmem:[%s0 + $0xf8] sm:$0xff]
  %v59 = vld [vmem:[%s0 + $0x100] sm:$0xff]
  %v60 = vld [vmem:[%s0 + $0x108] sm:$0xff]
  %v61 = vld [vmem:[%s0 + $0x110] sm:$0xff]
  %v62 = vld [vmem:[%s0 + $0x118] sm:$0xff]
  %v63 = vld [vmem:[%s0 + $0x120] sm:$0xff]
  %v64 = vld [vmem:[%s0 + $0x128] sm:$0xff]
  %v65 = vld [vmem:[%s0 + $0x130] sm:$0xff]
  %v66 = vld [vmem:[%s0 + $0x138] sm:$0xff]
  %v67 = vld [vmem:[%s0 + $0x140] sm:$0xff]
  %v68 = vld [vmem:[%s0 + $0x148] sm:$0xff]
  %v69 = vld [vmem:[%s0 + $0x150] sm:$0xff]
  %v70 = vld [vmem:[%s0 + $0x158] sm:$0xff]
  %v71 = vld [vmem:[%s0 + $0x160] sm:$0xff]
  %v72 = vld [vmem:[%s0 + $0x168] sm:$0xff]
  %v73 = vld [vmem:[%s0 + $0x170] sm:$0xff]
  %v74 = vld [vmem:[%s0 + $0x178] sm:$0xff]
  %v75 = vld [vmem:[%s0 + $0x180] sm:$0xff]
  %v76 = vld [vmem:[%s0 + $0x188] sm:$0xff]
  %v77 = vld [vmem:[%s0 + $0x190] sm:$0xff]
  %v78 = vld [vmem:[%s0 + $0x198] sm:$0xff]
  %v79 = vld [vmem:[%s0 + $0x1a0] sm:$0xff]
  %v80 = vld [vmem:[%s0 + $0x1a8] sm:$0xff]
  %v81 = vld [vmem:[%s0 + $0x1b0] sm:$0xff]
  %v82 = vld [vmem:[%s0 + $0x1b8] sm:$0xff]
  %v83 = vld [vmem:[%s0 + $0x1c0] sm:$0xff]
  %v84 = vld [vmem:[%s0 + $0x1c8] sm:$0xff]
  %v85 = vld [vmem:[%s0 + $0x1d0] sm:$0xff]
  %v86 = vld [vmem:[%s0 + $0x1d8] sm:$0xff]
  %v87 = vld [vmem:[%s0 + $0x1e0] sm:$0xff]
  %v88 = vld [vmem:[%s0 + $0x1e8] sm:$0xff]
  %v89 = vld [vmem:[%s0 + $0x1f0] sm:$0xff]
  %v90 = vld [vmem:[%s0 + $0x1f8] sm:$0xff]
  %v91 = vld [vmem:[%s0 + $0x200] sm:$0xff]
  %v92 = vld [vmem:[%s0 + $0x208] sm:$0xff]
  %v93 = vld [vmem:[%s0 + $0x210] sm:$0xff]
  %v94 = vld [vmem:[%s0 + $0x218] sm:$0xff]
  %v95 = vld [vmem:[%s0 + $0x220] sm:$0xff]
  %v96 = vld [vmem:[%s0 + $0x228] sm:$0xff]
  %v97 = vld [vmem:[%s0 + $0x230] sm:$0xff]
  %v98 = vld [vmem:[%s0 + $0x238] sm:$0xff]
  %v99 = vld [vmem:[%s0 + $0x240] sm:$0xff]
  %v100 = vld [vmem:[%s0 + $0x248] sm:$0xff]
  %v101 = vld [vmem:[%s0 + $0x250] sm:$0xff]
  %v102 = vld [vmem:[%s0 + $0x258] sm:$0xff]
  %v103 = vld [vmem:[%s0 + $0x260] sm:$0xff]
  %v104 = vld [vmem:[%s0 + $0x268] sm:$0xff]
  %v105 = vld [vmem:[%s0 + $0x270] sm:$0xff]
  %v106 = vld [vmem:[%s0 + $0x278] sm:$0xff]
  %v107 = vld [vmem:[%s0 + $0x280] sm:$0xff]
  %v108 = vld [vmem:[%s0 + $0x288] sm:$0xff]
  %v109 = vld [vmem:[%s0 + $0x290] sm:$0xff]
  %v110 = vld [vmem:[%s0 + $0x298] sm:$0xff]
  %v111 = vld [vmem:[%s0 + $0x2a0] sm:$0xff]
  %v112 = vld [vmem:[%s0 + $0x2a8] sm:$0xff]
  %v113 = vld [vmem:[%s0 + $0x2b0] sm:$0xff]
  %v114 = vld [vmem:[%s0 + $0x2b8] sm:$0xff]
  %v115 = vld [vmem:[%s0 + $0x2c0] sm:$0xff]
  %v116 = vld [vmem:[%s0 + $0x2c8] sm:$0xff]
  %v117 = vld [vmem:[%s0 + $0x2d0] sm:$0xff]
  %v118 = vld [vmem:[%s0 + $0x2d8] sm:$0xff]
  %v119 = vld [vmem:[%s0 + $0x2e0] sm:$0xff]
  %v120 = vld [vmem:[%s0 + $0x2e8] sm:$0xff]
  %v121 = vld [vmem:[%s0 + $0x2f0] sm:$0xff]
  %v122 = vld [vmem:[%s0 + $0x2f8] sm:$0xff]
  %v123 = vld [vmem:[%s0 + $0x300] sm:$0xff]
  %v124 = vld [vmem:[%s0 + $0x308] sm:$0xff]
  %v125 = vld [vmem:[%s0 + $0x310] sm:$0xff]
  %v126 = vld [vmem:[%s0 + $0x318] sm:$0xff]
  %v127 = vld [vmem:[%s0 + $0x320] sm:$0xff]
  %v128 = vld [vmem:[%s0 + $0x328] sm:$0xff]
  %v129 = vld [vmem:[%s0 + $0x330] sm:$0xff]
  %v130 = vld [vmem:[%s0 + $0x338] sm:$0xff]
  %v131 = vld [vmem:[%s0 + $0x340] sm:$0xff]
  %v132 = vld [vmem:[%s0 + $0x348] sm:$0xff]
  %v133 = vld [vmem:[%s0 + $0x350] sm:$0xff]
  %v134 = vld [vmem:[%s0 + $0x358] sm:$0xff]
  %v135 = vld [vmem:[%s0 + $0x360] sm:$0xff]
  %v136 = vld [vmem:[%s0 + $0x368] sm:$0xff]
  %v137 = vld [vmem:[%s0 + $0x370] sm:$0xff]
  %v138 = vld [vmem:[%s0 + $0x378] sm:$0xff]
  %v139 = vpack.c.bf16 %v34, %v27
  %v140 = vpack.c.bf16 %v35, %v28
  %v141 = vpack.c.bf16 %v36, %v29
  %v142 = vpack.c.bf16 %v37, %v30
  %v143 = vpack.c.bf16 %v38, %v31
  %v144 = vpack.c.bf16 %v39, %v32
  %v145 = vpack.c.bf16 %v40, %v33
  %v146 = vpack.c.bf16 %v48, %v41
  %v147 = vpack.c.bf16 %v49, %v42
  %v148 = vpack.c.bf16 %v50, %v43
  %v149 = vpack.c.bf16 %v51, %v44
  %v150 = vpack.c.bf16 %v52, %v45
  %v151 = vpack.c.bf16 %v53, %v46
  %v152 = vpack.c.bf16 %v54, %v47
  %v153 = vpack.c.bf16 %v62, %v55
  %v154 = vpack.c.bf16 %v63, %v56
  %v155 = vpack.c.bf16 %v64, %v57
  %v156 = vpack.c.bf16 %v65, %v58
  %v157 = vpack.c.bf16 %v66, %v59
  %v158 = vpack.c.bf16 %v67, %v60
  %v159 = vpack.c.bf16 %v68, %v61
  %v160 = vpack.c.bf16 %v76, %v69
  %v161 = vpack.c.bf16 %v77, %v70
  %v162 = vpack.c.bf16 %v78, %v71
  %v163 = vpack.c.bf16 %v79, %v72
  %v164 = vpack.c.bf16 %v80, %v73
  %v165 = vpack.c.bf16 %v81, %v74
  %v166 = vpack.c.bf16 %v82, %v75
  %v167 = vpack.c.bf16 %v90, %v83
  %v168 = vpack.c.bf16 %v91, %v84
  %v169 = vpack.c.bf16 %v92, %v85
  %v170 = vpack.c.bf16 %v93, %v86
  %v171 = vpack.c.bf16 %v94, %v87
  %v172 = vpack.c.bf16 %v95, %v88
  %v173 = vpack.c.bf16 %v96, %v89
  %v174 = vpack.c.bf16 %v104, %v97
  %v175 = vpack.c.bf16 %v105, %v98
  %v176 = vpack.c.bf16 %v106, %v99
  %v177 = vpack.c.bf16 %v107, %v100
  %v178 = vpack.c.bf16 %v108, %v101
  %v179 = vpack.c.bf16 %v109, %v102
  %v180 = vpack.c.bf16 %v110, %v103
  %v181 = vpack.c.bf16 %v118, %v111
  %v182 = vpack.c.bf16 %v119, %v112
  %v183 = vpack.c.bf16 %v120, %v113
  %v184 = vpack.c.bf16 %v121, %v114
  %v185 = vpack.c.bf16 %v122, %v115
  %v186 = vpack.c.bf16 %v123, %v116
  %v187 = vpack.c.bf16 %v124, %v117
  %v188 = vpack.c.bf16 %v132, %v125
  %v189 = vpack.c.bf16 %v133, %v126
  %v190 = vpack.c.bf16 %v134, %v127
  %v191 = vpack.c.bf16 %v135, %v128
  %v192 = vpack.c.bf16 %v136, %v129
  %v193 = vpack.c.bf16 %v137, %v130
  %v194 = vpack.c.bf16 %v138, %v131
  %v195 = vld [vmem:[%s1] sm:$0xf]
  %v196 = vld [vmem:[%s1 + $0x4] sm:$0xf]
  %v197 = vld [vmem:[%s1 + $0x8] sm:$0xf]
  %v198 = vld [vmem:[%s1 + $0xc] sm:$0xf]
  %v199 = vld [vmem:[%s1 + $0x10] sm:$0xf]
  %v200 = vld [vmem:[%s1 + $0x14] sm:$0xf]
  %v201 = vld [vmem:[%s1 + $0x18] sm:$0xf]
  %v202 = vld [vmem:[%s1 + $0x1c] sm:$0xf]
  %v203 = vld [vmem:[%s1 + $0x20] sm:$0xf]
  %v204 = vld [vmem:[%s1 + $0x24] sm:$0xf]
  %v205 = vld [vmem:[%s1 + $0x28] sm:$0xf]
  %v206 = vld [vmem:[%s1 + $0x2c] sm:$0xf]
  %v207 = vld [vmem:[%s1 + $0x30] sm:$0xf]
  %v208 = vld [vmem:[%s1 + $0x34] sm:$0xf]
  %v209 = vld [vmem:[%s1 + $0x38] sm:$0xf]
  %v210 = vld [vmem:[%s1 + $0x3c] sm:$0xf]
  %v211 = vld [vmem:[%s1 + $0x40] sm:$0xf]
  %v212 = vld [vmem:[%s1 + $0x44] sm:$0xf]
  %v213 = vld [vmem:[%s1 + $0x48] sm:$0xf]
  %v214 = vld [vmem:[%s1 + $0x4c] sm:$0xf]
  %v215 = vld [vmem:[%s1 + $0x50] sm:$0xf]
  %v216 = vld [vmem:[%s1 + $0x54] sm:$0xf]
  %v217 = vld [vmem:[%s1 + $0x58] sm:$0xf]
  %v218 = vld [vmem:[%s1 + $0x5c] sm:$0xf]
  %v219 = vld [vmem:[%s1 + $0x60] sm:$0xf]
  %v220 = vld [vmem:[%s1 + $0x64] sm:$0xf]
  %v221 = vld [vmem:[%s1 + $0x68] sm:$0xf]
  %v222 = vld [vmem:[%s1 + $0x6c] sm:$0xf]
  %v223 = vld [vmem:[%s1 + $0x70] sm:$0xf]
  %v224 = vld [vmem:[%s1 + $0x74] sm:$0xf]
  %v225 = vld [vmem:[%s1 + $0x78] sm:$0xf]
  %v226 = vld [vmem:[%s1 + $0x7c] sm:$0xf]
  %v227 = vld [vmem:[%s1 + $0x80] sm:$0xf]
  %v228 = vld [vmem:[%s1 + $0x84] sm:$0xf]
  %v229 = vld [vmem:[%s1 + $0x88] sm:$0xf]
  %v230 = vld [vmem:[%s1 + $0x8c] sm:$0xf]
  %v231 = vld [vmem:[%s1 + $0x90] sm:$0xf]
  %v232 = vld [vmem:[%s1 + $0x94] sm:$0xf]
  %v233 = vld [vmem:[%s1 + $0x98] sm:$0xf]
  %v234 = vld [vmem:[%s1 + $0x9c] sm:$0xf]
  %v235 = vld [vmem:[%s1 + $0xa0] sm:$0xf]
  %v236 = vld [vmem:[%s1 + $0xa4] sm:$0xf]
  %v237 = vld [vmem:[%s1 + $0xa8] sm:$0xf]
  %v238 = vld [vmem:[%s1 + $0xac] sm:$0xf]
  %v239 = vld [vmem:[%s1 + $0xb0] sm:$0xf]
  %v240 = vld [vmem:[%s1 + $0xb4] sm:$0xf]
  %v241 = vld [vmem:[%s1 + $0xb8] sm:$0xf]
  %v242 = vld [vmem:[%s1 + $0xbc] sm:$0xf]
  %v243 = vld [vmem:[%s1 + $0xc0] sm:$0xf]
  %v244 = vld [vmem:[%s1 + $0xc4] sm:$0xf]
  %v245 = vld [vmem:[%s1 + $0xc8] sm:$0xf]
  %v246 = vld [vmem:[%s1 + $0xcc] sm:$0xf]
  %v247 = vld [vmem:[%s1 + $0xd0] sm:$0xf]
  %v248 = vld [vmem:[%s1 + $0xd4] sm:$0xf]
  %v249 = vld [vmem:[%s1 + $0xd8] sm:$0xf]
  %v250 = vld [vmem:[%s1 + $0xdc] sm:$0xf]
  %v251 = vld [vmem:[%s1 + $0xe0] sm:$0xf]
  %v252 = vld [vmem:[%s1 + $0xe4] sm:$0xf]
  %v253 = vld [vmem:[%s1 + $0xe8] sm:$0xf]
  %v254 = vld [vmem:[%s1 + $0xec] sm:$0xf]
  %v255 = vld [vmem:[%s1 + $0xf0] sm:$0xf]
  %v256 = vld [vmem:[%s1 + $0xf4] sm:$0xf]
  %v257 = vld [vmem:[%s1 + $0xf8] sm:$0xf]
  %v258 = vld [vmem:[%s1 + $0xfc] sm:$0xf]
  %v259 = vld [vmem:[%s1 + $0x100] sm:$0xf]
  %v260 = vld [vmem:[%s1 + $0x104] sm:$0xf]
  %v261 = vld [vmem:[%s1 + $0x108] sm:$0xf]
  %v262 = vld [vmem:[%s1 + $0x10c] sm:$0xf]
  %v263 = vld [vmem:[%s1 + $0x110] sm:$0xf]
  %v264 = vld [vmem:[%s1 + $0x114] sm:$0xf]
  %v265 = vld [vmem:[%s1 + $0x118] sm:$0xf]
  %v266 = vld [vmem:[%s1 + $0x11c] sm:$0xf]
  %v267 = vld [vmem:[%s1 + $0x120] sm:$0xf]
  %v268 = vld [vmem:[%s1 + $0x124] sm:$0xf]
  %v269 = vld [vmem:[%s1 + $0x128] sm:$0xf]
  %v270 = vld [vmem:[%s1 + $0x12c] sm:$0xf]
  %v271 = vld [vmem:[%s1 + $0x130] sm:$0xf]
  %v272 = vld [vmem:[%s1 + $0x134] sm:$0xf]
  %v273 = vld [vmem:[%s1 + $0x138] sm:$0xf]
  %v274 = vld [vmem:[%s1 + $0x13c] sm:$0xf]
  %v275 = vld [vmem:[%s1 + $0x140] sm:$0xf]
  %v276 = vld [vmem:[%s1 + $0x144] sm:$0xf]
  %v277 = vld [vmem:[%s1 + $0x148] sm:$0xf]
  %v278 = vld [vmem:[%s1 + $0x14c] sm:$0xf]
  %v279 = vld [vmem:[%s1 + $0x150] sm:$0xf]
  %v280 = vld [vmem:[%s1 + $0x154] sm:$0xf]
  %v281 = vld [vmem:[%s1 + $0x158] sm:$0xf]
  %v282 = vld [vmem:[%s1 + $0x15c] sm:$0xf]
  %v283 = vld [vmem:[%s1 + $0x160] sm:$0xf]
  %v284 = vld [vmem:[%s1 + $0x164] sm:$0xf]
  %v285 = vld [vmem:[%s1 + $0x168] sm:$0xf]
  %v286 = vld [vmem:[%s1 + $0x16c] sm:$0xf]
  %v287 = vld [vmem:[%s1 + $0x170] sm:$0xf]
  %v288 = vld [vmem:[%s1 + $0x174] sm:$0xf]
  %v289 = vld [vmem:[%s1 + $0x178] sm:$0xf]
  %v290 = vld [vmem:[%s1 + $0x17c] sm:$0xf]
  %v291 = vld [vmem:[%s1 + $0x180] sm:$0xf]
  %v292 = vld [vmem:[%s1 + $0x184] sm:$0xf]
  %v293 = vld [vmem:[%s2] sm:$0x1]
  %v295 = vlaneseq
  %v296 = vshrl.u32 %v295, 7
  %v297 = vsub.s32 0, %v296
  %v298 = vrot.slane %v293, %v297
  %v398 = vunpack.c.l.b16 %v195
  %v399 = vunpack.c.l.b16 %v196
  %v400 = vunpack.c.l.b16 %v197
  %v401 = vunpack.c.l.b16 %v198
  %v402 = vunpack.c.l.b16 %v199
  %v403 = vunpack.c.l.b16 %v200
  %v404 = vunpack.c.l.b16 %v201
  %v405 = vunpack.c.l.b16 %v202
  %v406 = vunpack.c.l.b16 %v203
  %v407 = vunpack.c.l.b16 %v204
  %v408 = vunpack.c.l.b16 %v205
  %v409 = vunpack.c.l.b16 %v206
  %v410 = vunpack.c.l.b16 %v207
  %v411 = vunpack.c.l.b16 %v208
  %v412 = vunpack.c.l.b16 %v209
  %v413 = vunpack.c.l.b16 %v210
  %v414 = vunpack.c.l.b16 %v211
  %v415 = vunpack.c.l.b16 %v212
  %v416 = vunpack.c.l.b16 %v213
  %v417 = vunpack.c.l.b16 %v214
  %v418 = vunpack.c.l.b16 %v215
  %v419 = vunpack.c.l.b16 %v216
  %v420 = vunpack.c.l.b16 %v217
  %v421 = vunpack.c.l.b16 %v218
  %v422 = vunpack.c.l.b16 %v219
  %v423 = vunpack.c.l.b16 %v220
  %v424 = vunpack.c.l.b16 %v221
  %v425 = vunpack.c.l.b16 %v222
  %v426 = vunpack.c.l.b16 %v223
  %v427 = vunpack.c.l.b16 %v224
  %v428 = vunpack.c.l.b16 %v225
  %v429 = vunpack.c.l.b16 %v226
  %v430 = vunpack.c.l.b16 %v227
  %v431 = vunpack.c.l.b16 %v228
  %v432 = vunpack.c.l.b16 %v229
  %v433 = vunpack.c.l.b16 %v230
  %v434 = vunpack.c.l.b16 %v231
  %v435 = vunpack.c.l.b16 %v232
  %v436 = vunpack.c.l.b16 %v233
  %v437 = vunpack.c.l.b16 %v234
  %v438 = vunpack.c.l.b16 %v235
  %v439 = vunpack.c.l.b16 %v236
  %v440 = vunpack.c.l.b16 %v237
  %v441 = vunpack.c.l.b16 %v238
  %v442 = vunpack.c.l.b16 %v239
  %v443 = vunpack.c.l.b16 %v240
  %v444 = vunpack.c.l.b16 %v241
  %v445 = vunpack.c.l.b16 %v242
  %v446 = vunpack.c.l.b16 %v243
  %v447 = vunpack.c.l.b16 %v244
  %v448 = vunpack.c.l.b16 %v245
  %v449 = vunpack.c.l.b16 %v246
  %v450 = vunpack.c.l.b16 %v247
  %v451 = vunpack.c.l.b16 %v248
  %v452 = vunpack.c.l.b16 %v249
  %v453 = vunpack.c.l.b16 %v250
  %v454 = vunpack.c.l.b16 %v251
  %v455 = vunpack.c.l.b16 %v252
  %v456 = vunpack.c.l.b16 %v253
  %v457 = vunpack.c.l.b16 %v254
  %v458 = vunpack.c.l.b16 %v255
  %v459 = vunpack.c.l.b16 %v256
  %v460 = vunpack.c.l.b16 %v257
  %v461 = vunpack.c.l.b16 %v258
  %v462 = vunpack.c.l.b16 %v259
  %v463 = vunpack.c.l.b16 %v260
  %v464 = vunpack.c.l.b16 %v261
  %v465 = vunpack.c.l.b16 %v262
  %v466 = vunpack.c.l.b16 %v263
  %v467 = vunpack.c.l.b16 %v264
  %v468 = vunpack.c.l.b16 %v265
  %v469 = vunpack.c.l.b16 %v266
  %v470 = vunpack.c.l.b16 %v267
  %v471 = vunpack.c.l.b16 %v268
  %v472 = vunpack.c.l.b16 %v269
  %v473 = vunpack.c.l.b16 %v270
  %v474 = vunpack.c.l.b16 %v271
  %v475 = vunpack.c.l.b16 %v272
  %v476 = vunpack.c.l.b16 %v273
  %v477 = vunpack.c.l.b16 %v274
  %v478 = vunpack.c.l.b16 %v275
  %v479 = vunpack.c.l.b16 %v276
  %v480 = vunpack.c.l.b16 %v277
  %v481 = vunpack.c.l.b16 %v278
  %v482 = vunpack.c.l.b16 %v279
  %v483 = vunpack.c.l.b16 %v280
  %v484 = vunpack.c.l.b16 %v281
  %v485 = vunpack.c.l.b16 %v282
  %v486 = vunpack.c.l.b16 %v283
  %v487 = vunpack.c.l.b16 %v284
  %v488 = vunpack.c.l.b16 %v285
  %v489 = vunpack.c.l.b16 %v286
  %v490 = vunpack.c.l.b16 %v287
  %v491 = vunpack.c.l.b16 %v288
  %v492 = vunpack.c.l.b16 %v289
  %v493 = vunpack.c.l.b16 %v290
  %v494 = vunpack.c.l.b16 %v291
  %v495 = vunpack.c.l.b16 %v292
  %v496 = vpack.c.b16 %v399, %v398
  %v497 = vpack.c.b16 %v401, %v400
  %v498 = vpack.c.b16 %v403, %v402
  %v499 = vpack.c.b16 %v405, %v404
  %v500 = vpack.c.b16 %v407, %v406
  %v501 = vpack.c.b16 %v409, %v408
  %v502 = vpack.c.b16 %v411, %v410
  %v503 = vpack.c.b16 %v413, %v412
  %v504 = vpack.c.b16 %v415, %v414
  %v505 = vpack.c.b16 %v417, %v416
  %v506 = vpack.c.b16 %v419, %v418
  %v507 = vpack.c.b16 %v421, %v420
  %v508 = vpack.c.b16 %v423, %v422
  %v509 = vpack.c.b16 %v425, %v424
  %v510 = vpack.c.b16 %v427, %v426
  %v511 = vpack.c.b16 %v429, %v428
  %v512 = vpack.c.b16 %v431, %v430
  %v513 = vpack.c.b16 %v433, %v432
  %v514 = vpack.c.b16 %v435, %v434
  %v515 = vpack.c.b16 %v437, %v436
  %v516 = vpack.c.b16 %v439, %v438
  %v517 = vpack.c.b16 %v441, %v440
  %v518 = vpack.c.b16 %v443, %v442
  %v519 = vpack.c.b16 %v445, %v444
  %v520 = vpack.c.b16 %v447, %v446
  %v521 = vpack.c.b16 %v449, %v448
  %v522 = vpack.c.b16 %v451, %v450
  %v523 = vpack.c.b16 %v453, %v452
  %v524 = vpack.c.b16 %v455, %v454
  %v525 = vpack.c.b16 %v457, %v456
  %v526 = vpack.c.b16 %v459, %v458
  %v527 = vpack.c.b16 %v461, %v460
  %v528 = vpack.c.b16 %v463, %v462
  %v529 = vpack.c.b16 %v465, %v464
  %v530 = vpack.c.b16 %v467, %v466
  %v531 = vpack.c.b16 %v469, %v468
  %v532 = vpack.c.b16 %v471, %v470
  %v533 = vpack.c.b16 %v473, %v472
  %v534 = vpack.c.b16 %v475, %v474
  %v535 = vpack.c.b16 %v477, %v476
  %v536 = vpack.c.b16 %v479, %v478
  %v537 = vpack.c.b16 %v481, %v480
  %v538 = vpack.c.b16 %v483, %v482
  %v539 = vpack.c.b16 %v485, %v484
  %v540 = vpack.c.b16 %v487, %v486
  %v541 = vpack.c.b16 %v489, %v488
  %v542 = vpack.c.b16 %v491, %v490
  %v543 = vpack.c.b16 %v493, %v492
  %v544 = vpack.c.b16 %v495, %v494
  %vm594 = vcmask 130048
  %v596 = vsel %vm594, %v145, 0
  %v599 = vsel %vm594, %v152, 0
  %v602 = vsel %vm594, %v159, 0
  %v605 = vsel %vm594, %v166, 0
  %v608 = vsel %vm594, %v173, 0
  %v611 = vsel %vm594, %v180, 0
  %v614 = vsel %vm594, %v187, 0
  %v617 = vsel %vm594, %v194, 0
  %619 = vmatprep.subr.bf16.mxu0 0
  %620 = vmatpush1.bf16.msra.mxu0 %v496
  %621 = vmatprep.subr.bf16.mxu0 0
  %622 = vmatpush1.bf16.msra.mxu0 %v497
  %623 = vmatprep.subr.bf16.mxu0 0
  %624 = vmatpush1.bf16.msra.mxu0 %v498
  %625 = vmatprep.subr.bf16.mxu0 0
  %626 = vmatpush1.bf16.msra.mxu0 %v499
  %627 = vmatprep.subr.bf16.mxu0 0
  %628 = vmatpush1.bf16.msra.mxu0 %v500
  %629 = vmatprep.subr.bf16.mxu0 0
  %630 = vmatpush1.bf16.msra.mxu0 %v501
  %631 = vmatprep.subr.bf16.mxu0 0
  %632 = vmatpush1.bf16.msra.mxu0 %v502
  %633 = vmatprep.subr.bf16.mxu0 0
  %634 = vmatpush1.bf16.msra.mxu0 %v503
  %635 = vmatprep.subr.bf16.mxu0 0
  %636 = vmatpush1.bf16.msra.mxu0 %v504
  %637 = vmatprep.subr.bf16.mxu0 0
  %638 = vmatpush1.bf16.msra.mxu0 %v505
  %639 = vmatprep.subr.bf16.mxu0 0
  %640 = vmatpush1.bf16.msra.mxu0 %v506
  %641 = vmatprep.subr.bf16.mxu0 0
  %642 = vmatpush1.bf16.msra.mxu0 %v507
  %643 = vmatprep.subr.bf16.mxu0 0
  %644 = vmatpush1.bf16.msra.mxu0 %v508
  %645 = vmatprep.subr.bf16.mxu0 0
  %646 = vmatpush1.bf16.msra.mxu0 %v509
  %647 = vmatprep.subr.bf16.mxu0 0
  %648 = vmatpush1.bf16.msra.mxu0 %v510
  %649 = vmatprep.subr.bf16.mxu0 0
  %650 = vmatpush1.bf16.msra.mxu0 %v511
  %651 = vmatprep.mubr.bf16.mxu0 %v140
  %652 = vmatmul.mubr.bf16.gmra.mrb[0].mxu0 %v139
  %v653 = vpop.f32.mrb[0].mxu0
  %v654 = vadd.f32 %v298, %v653
  %v655 = vpop.f32.mrb[0].mxu0
  %v656 = vpop.f32.mrb[0].mxu0
  %v657 = vadd.f32 %v298, %v656
  %v658 = vpop.f32.mrb[0].mxu0
  %659 = vmatprep.mubr.bf16.mxu0 %v147
  %660 = vmatmul.mubr.bf16.gmra.mrb[0].mxu0 %v146
  %v661 = vpop.f32.mrb[0].mxu0
  %v662 = vadd.f32 %v298, %v661
  %v663 = vpop.f32.mrb[0].mxu0
  %v664 = vpop.f32.mrb[0].mxu0
  %v665 = vadd.f32 %v298, %v664
  %v666 = vpop.f32.mrb[0].mxu0
  %667 = vmatprep.mubr.bf16.mxu0 %v154
  %668 = vmatmul.mubr.bf16.gmra.mrb[0].mxu0 %v153
  %v669 = vpop.f32.mrb[0].mxu0
  %v670 = vadd.f32 %v298, %v669
  %v671 = vpop.f32.mrb[0].mxu0
  %v672 = vpop.f32.mrb[0].mxu0
  %v673 = vadd.f32 %v298, %v672
  %v674 = vpop.f32.mrb[0].mxu0
  %675 = vmatprep.mubr.bf16.mxu0 %v161
  %676 = vmatmul.mubr.bf16.gmra.mrb[0].mxu0 %v160
  %v677 = vpop.f32.mrb[0].mxu0
  %v678 = vadd.f32 %v298, %v677
  %v679 = vpop.f32.mrb[0].mxu0
  %v680 = vpop.f32.mrb[0].mxu0
  %v681 = vadd.f32 %v298, %v680
  %v682 = vpop.f32.mrb[0].mxu0
  %683 = vmatprep.mubr.bf16.mxu0 %v168
  %684 = vmatmul.mubr.bf16.gmra.mrb[0].mxu0 %v167
  %v685 = vpop.f32.mrb[0].mxu0
  %v686 = vadd.f32 %v298, %v685
  %v687 = vpop.f32.mrb[0].mxu0
  %v688 = vpop.f32.mrb[0].mxu0
  %v689 = vadd.f32 %v298, %v688
  %v690 = vpop.f32.mrb[0].mxu0
  %691 = vmatprep.mubr.bf16.mxu0 %v175
  %692 = vmatmul.mubr.bf16.gmra.mrb[0].mxu0 %v174
  %v693 = vpop.f32.mrb[0].mxu0
  %v694 = vadd.f32 %v298, %v693
  %v695 = vpop.f32.mrb[0].mxu0
  %v696 = vpop.f32.mrb[0].mxu0
  %v697 = vadd.f32 %v298, %v696
  %v698 = vpop.f32.mrb[0].mxu0
  %699 = vmatprep.mubr.bf16.mxu0 %v182
  %700 = vmatmul.mubr.bf16.gmra.mrb[0].mxu0 %v181
  %v701 = vpop.f32.mrb[0].mxu0
  %v702 = vadd.f32 %v298, %v701
  %v703 = vpop.f32.mrb[0].mxu0
  %v704 = vpop.f32.mrb[0].mxu0
  %v705 = vadd.f32 %v298, %v704
  %v706 = vpop.f32.mrb[0].mxu0
  %707 = vmatprep.mubr.bf16.mxu0 %v189
  %708 = vmatmul.mubr.bf16.gmra.mrb[0].mxu0 %v188
  %v709 = vpop.f32.mrb[0].mxu0
  %v710 = vadd.f32 %v298, %v709
  %v711 = vpop.f32.mrb[0].mxu0
  %v712 = vpop.f32.mrb[0].mxu0
  %v713 = vadd.f32 %v298, %v712
  %v714 = vpop.f32.mrb[0].mxu0
  %715 = vdwg.mxu0
  %716 = vmatprep.subr.bf16.mxu0 0
  %717 = vmatpush1.bf16.msra.mxu0 %v512
  %718 = vmatprep.subr.bf16.mxu0 0
  %719 = vmatpush1.bf16.msra.mxu0 %v513
  %720 = vmatprep.subr.bf16.mxu0 0
  %721 = vmatpush1.bf16.msra.mxu0 %v514
  %722 = vmatprep.subr.bf16.mxu0 0
  %723 = vmatpush1.bf16.msra.mxu0 %v515
  %724 = vmatprep.subr.bf16.mxu0 0
  %725 = vmatpush1.bf16.msra.mxu0 %v516
  %726 = vmatprep.subr.bf16.mxu0 0
  %727 = vmatpush1.bf16.msra.mxu0 %v517
  %728 = vmatprep.subr.bf16.mxu0 0
  %729 = vmatpush1.bf16.msra.mxu0 %v518
  %730 = vmatprep.subr.bf16.mxu0 0
  %731 = vmatpush1.bf16.msra.mxu0 %v519
  %732 = vmatprep.subr.bf16.mxu0 0
  %733 = vmatpush1.bf16.msra.mxu0 %v520
  %734 = vmatprep.subr.bf16.mxu0 0
  %735 = vmatpush1.bf16.msra.mxu0 %v521
  %736 = vmatprep.subr.bf16.mxu0 0
  %737 = vmatpush1.bf16.msra.mxu0 %v522
  %738 = vmatprep.subr.bf16.mxu0 0
  %739 = vmatpush1.bf16.msra.mxu0 %v523
  %740 = vmatprep.subr.bf16.mxu0 0
  %741 = vmatpush1.bf16.msra.mxu0 %v524
  %742 = vmatprep.subr.bf16.mxu0 0
  %743 = vmatpush1.bf16.msra.mxu0 %v525
  %744 = vmatprep.subr.bf16.mxu0 0
  %745 = vmatpush1.bf16.msra.mxu0 %v526
  %746 = vmatprep.subr.bf16.mxu0 0
  %747 = vmatpush1.bf16.msra.mxu0 %v527
  %748 = vmatprep.mubr.bf16.mxu0 %v142
  %749 = vmatmul.mubr.bf16.gmra.mrb[0].mxu0 %v141
  %v750 = vpop.f32.mrb[0].mxu0
  %v751 = vadd.f32 %v654, %v750
  %v752 = vpop.f32.mrb[0].mxu0
  %v753 = vpop.f32.mrb[0].mxu0
  %v754 = vadd.f32 %v657, %v753
  %v755 = vpop.f32.mrb[0].mxu0
  %756 = vmatprep.mubr.bf16.mxu0 %v149
  %757 = vmatmul.mubr.bf16.gmra.mrb[0].mxu0 %v148
  %v758 = vpop.f32.mrb[0].mxu0
  %v759 = vadd.f32 %v662, %v758
  %v760 = vpop.f32.mrb[0].mxu0
  %v761 = vpop.f32.mrb[0].mxu0
  %v762 = vadd.f32 %v665, %v761
  %v763 = vpop.f32.mrb[0].mxu0
  %764 = vmatprep.mubr.bf16.mxu0 %v156
  %765 = vmatmul.mubr.bf16.gmra.mrb[0].mxu0 %v155
  %v766 = vpop.f32.mrb[0].mxu0
  %v767 = vadd.f32 %v670, %v766
  %v768 = vpop.f32.mrb[0].mxu0
  %v769 = vpop.f32.mrb[0].mxu0
  %v770 = vadd.f32 %v673, %v769
  %v771 = vpop.f32.mrb[0].mxu0
  %772 = vmatprep.mubr.bf16.mxu0 %v163
  %773 = vmatmul.mubr.bf16.gmra.mrb[0].mxu0 %v162
  %v774 = vpop.f32.mrb[0].mxu0
  %v775 = vadd.f32 %v678, %v774
  %v776 = vpop.f32.mrb[0].mxu0
  %v777 = vpop.f32.mrb[0].mxu0
  %v778 = vadd.f32 %v681, %v777
  %v779 = vpop.f32.mrb[0].mxu0
  %780 = vmatprep.mubr.bf16.mxu0 %v170
  %781 = vmatmul.mubr.bf16.gmra.mrb[0].mxu0 %v169
  %v782 = vpop.f32.mrb[0].mxu0
  %v783 = vadd.f32 %v686, %v782
  %v784 = vpop.f32.mrb[0].mxu0
  %v785 = vpop.f32.mrb[0].mxu0
  %v786 = vadd.f32 %v689, %v785
  %v787 = vpop.f32.mrb[0].mxu0
  %788 = vmatprep.mubr.bf16.mxu0 %v177
  %789 = vmatmul.mubr.bf16.gmra.mrb[0].mxu0 %v176
  %v790 = vpop.f32.mrb[0].mxu0
  %v791 = vadd.f32 %v694, %v790
  %v792 = vpop.f32.mrb[0].mxu0
  %v793 = vpop.f32.mrb[0].mxu0
  %v794 = vadd.f32 %v697, %v793
  %v795 = vpop.f32.mrb[0].mxu0
  %796 = vmatprep.mubr.bf16.mxu0 %v184
  %797 = vmatmul.mubr.bf16.gmra.mrb[0].mxu0 %v183
  %v798 = vpop.f32.mrb[0].mxu0
  %v799 = vadd.f32 %v702, %v798
  %v800 = vpop.f32.mrb[0].mxu0
  %v801 = vpop.f32.mrb[0].mxu0
  %v802 = vadd.f32 %v705, %v801
  %v803 = vpop.f32.mrb[0].mxu0
  %804 = vmatprep.mubr.bf16.mxu0 %v191
  %805 = vmatmul.mubr.bf16.gmra.mrb[0].mxu0 %v190
  %v806 = vpop.f32.mrb[0].mxu0
  %v807 = vadd.f32 %v710, %v806
  %v808 = vpop.f32.mrb[0].mxu0
  %v809 = vpop.f32.mrb[0].mxu0
  %v810 = vadd.f32 %v713, %v809
  %v811 = vpop.f32.mrb[0].mxu0
  %812 = vdwg.mxu0
  %813 = vmatprep.subr.bf16.mxu0 0
  %814 = vmatpush1.bf16.msra.mxu0 %v528
  %815 = vmatprep.subr.bf16.mxu0 0
  %816 = vmatpush1.bf16.msra.mxu0 %v529
  %817 = vmatprep.subr.bf16.mxu0 0
  %818 = vmatpush1.bf16.msra.mxu0 %v530
  %819 = vmatprep.subr.bf16.mxu0 0
  %820 = vmatpush1.bf16.msra.mxu0 %v531
  %821 = vmatprep.subr.bf16.mxu0 0
  %822 = vmatpush1.bf16.msra.mxu0 %v532
  %823 = vmatprep.subr.bf16.mxu0 0
  %824 = vmatpush1.bf16.msra.mxu0 %v533
  %825 = vmatprep.subr.bf16.mxu0 0
  %826 = vmatpush1.bf16.msra.mxu0 %v534
  %827 = vmatprep.subr.bf16.mxu0 0
  %828 = vmatpush1.bf16.msra.mxu0 %v535
  %829 = vmatprep.subr.bf16.mxu0 0
  %830 = vmatpush1.bf16.msra.mxu0 %v536
  %831 = vmatprep.subr.bf16.mxu0 0
  %832 = vmatpush1.bf16.msra.mxu0 %v537
  %833 = vmatprep.subr.bf16.mxu0 0
  %834 = vmatpush1.bf16.msra.mxu0 %v538
  %835 = vmatprep.subr.bf16.mxu0 0
  %836 = vmatpush1.bf16.msra.mxu0 %v539
  %837 = vmatprep.subr.bf16.mxu0 0
  %838 = vmatpush1.bf16.msra.mxu0 %v540
  %839 = vmatprep.subr.bf16.mxu0 0
  %840 = vmatpush1.bf16.msra.mxu0 %v541
  %841 = vmatprep.subr.bf16.mxu0 0
  %842 = vmatpush1.bf16.msra.mxu0 %v542
  %843 = vmatprep.subr.bf16.mxu0 0
  %844 = vmatpush1.bf16.msra.mxu0 %v543
  %845 = vmatprep.mubr.bf16.mxu0 %v144
  %846 = vmatmul.mubr.bf16.gmra.mrb[0].mxu0 %v143
  %v847 = vpop.f32.mrb[0].mxu0
  %v848 = vadd.f32 %v751, %v847
  %v849 = vpop.f32.mrb[0].mxu0
  %v850 = vpop.f32.mrb[0].mxu0
  %v851 = vadd.f32 %v754, %v850
  %v852 = vpop.f32.mrb[0].mxu0
  %853 = vmatprep.mubr.bf16.mxu0 %v151
  %854 = vmatmul.mubr.bf16.gmra.mrb[0].mxu0 %v150
  %v855 = vpop.f32.mrb[0].mxu0
  %v856 = vadd.f32 %v759, %v855
  %v857 = vpop.f32.mrb[0].mxu0
  %v858 = vpop.f32.mrb[0].mxu0
  %v859 = vadd.f32 %v762, %v858
  %v860 = vpop.f32.mrb[0].mxu0
  %861 = vmatprep.mubr.bf16.mxu0 %v158
  %862 = vmatmul.mubr.bf16.gmra.mrb[0].mxu0 %v157
  %v863 = vpop.f32.mrb[0].mxu0
  %v864 = vadd.f32 %v767, %v863
  %v865 = vpop.f32.mrb[0].mxu0
  %v866 = vpop.f32.mrb[0].mxu0
  %v867 = vadd.f32 %v770, %v866
  %v868 = vpop.f32.mrb[0].mxu0
  %869 = vmatprep.mubr.bf16.mxu0 %v165
  %870 = vmatmul.mubr.bf16.gmra.mrb[0].mxu0 %v164
  %v871 = vpop.f32.mrb[0].mxu0
  %v872 = vadd.f32 %v775, %v871
  %v873 = vpop.f32.mrb[0].mxu0
  %v874 = vpop.f32.mrb[0].mxu0
  %v875 = vadd.f32 %v778, %v874
  %v876 = vpop.f32.mrb[0].mxu0
  %877 = vmatprep.mubr.bf16.mxu0 %v172
  %878 = vmatmul.mubr.bf16.gmra.mrb[0].mxu0 %v171
  %v879 = vpop.f32.mrb[0].mxu0
  %v880 = vadd.f32 %v783, %v879
  %v881 = vpop.f32.mrb[0].mxu0
  %v882 = vpop.f32.mrb[0].mxu0
  %v883 = vadd.f32 %v786, %v882
  %v884 = vpop.f32.mrb[0].mxu0
  %885 = vmatprep.mubr.bf16.mxu0 %v179
  %886 = vmatmul.mubr.bf16.gmra.mrb[0].mxu0 %v178
  %v887 = vpop.f32.mrb[0].mxu0
  %v888 = vadd.f32 %v791, %v887
  %v889 = vpop.f32.mrb[0].mxu0
  %v890 = vpop.f32.mrb[0].mxu0
  %v891 = vadd.f32 %v794, %v890
  %v892 = vpop.f32.mrb[0].mxu0
  %893 = vmatprep.mubr.bf16.mxu0 %v186
  %894 = vmatmul.mubr.bf16.gmra.mrb[0].mxu0 %v185
  %v895 = vpop.f32.mrb[0].mxu0
  %v896 = vadd.f32 %v799, %v895
  %v897 = vpop.f32.mrb[0].mxu0
  %v898 = vpop.f32.mrb[0].mxu0
  %v899 = vadd.f32 %v802, %v898
  %v900 = vpop.f32.mrb[0].mxu0
  %901 = vmatprep.mubr.bf16.mxu0 %v193
  %902 = vmatmul.mubr.bf16.gmra.mrb[0].mxu0 %v192
  %v903 = vpop.f32.mrb[0].mxu0
  %v904 = vadd.f32 %v807, %v903
  %v905 = vpop.f32.mrb[0].mxu0
  %v906 = vpop.f32.mrb[0].mxu0
  %v907 = vadd.f32 %v810, %v906
  %v908 = vpop.f32.mrb[0].mxu0
  %909 = vdwg.mxu0
  %910 = vmatprep.subr.bf16.mxu0 0
  %911 = vmatpush1.bf16.msra.mxu0 %v544
  %912 = vmatprep.subr.bf16.mxu0 0
  %913 = vmatpush1.bf16.msra.mxu0 0
  %914 = vmatprep.subr.bf16.mxu0 0
  %915 = vmatpush1.bf16.msra.mxu0 0
  %916 = vmatprep.subr.bf16.mxu0 0
  %917 = vmatpush1.bf16.msra.mxu0 0
  %918 = vmatprep.subr.bf16.mxu0 0
  %919 = vmatpush1.bf16.msra.mxu0 0
  %920 = vmatprep.subr.bf16.mxu0 0
  %921 = vmatpush1.bf16.msra.mxu0 0
  %922 = vmatprep.subr.bf16.mxu0 0
  %923 = vmatpush1.bf16.msra.mxu0 0
  %924 = vmatprep.subr.bf16.mxu0 0
  %925 = vmatpush1.bf16.msra.mxu0 0
  %926 = vmatprep.subr.bf16.mxu0 0
  %927 = vmatpush1.bf16.msra.mxu0 0
  %928 = vmatprep.subr.bf16.mxu0 0
  %929 = vmatpush1.bf16.msra.mxu0 0
  %930 = vmatprep.subr.bf16.mxu0 0
  %931 = vmatpush1.bf16.msra.mxu0 0
  %932 = vmatprep.subr.bf16.mxu0 0
  %933 = vmatpush1.bf16.msra.mxu0 0
  %934 = vmatprep.subr.bf16.mxu0 0
  %935 = vmatpush1.bf16.msra.mxu0 0
  %936 = vmatprep.subr.bf16.mxu0 0
  %937 = vmatpush1.bf16.msra.mxu0 0
  %938 = vmatprep.subr.bf16.mxu0 0
  %939 = vmatpush1.bf16.msra.mxu0 0
  %940 = vmatprep.subr.bf16.mxu0 0
  %941 = vmatpush1.bf16.msra.mxu0 0
  %942 = vmatprep.mubr.bf16.mxu0 0
  %943 = vmatmul.mubr.bf16.gmra.mrb[0].mxu0 %v596
  %v944 = vpop.f32.mrb[0].mxu0
  %v945 = vadd.f32 %v848, %v944
  %v946 = vpop.f32.mrb[0].mxu0
  %v947 = vpop.f32.mrb[0].mxu0
  %v948 = vadd.f32 %v851, %v947
  %v949 = vpop.f32.mrb[0].mxu0
  %950 = vmatprep.mubr.bf16.mxu0 0
  %951 = vmatmul.mubr.bf16.gmra.mrb[0].mxu0 %v599
  %v952 = vpop.f32.mrb[0].mxu0
  %v953 = vadd.f32 %v856, %v952
  %v954 = vpop.f32.mrb[0].mxu0
  %v955 = vpop.f32.mrb[0].mxu0
  %v956 = vadd.f32 %v859, %v955
  %v957 = vpop.f32.mrb[0].mxu0
  %958 = vmatprep.mubr.bf16.mxu0 0
  %959 = vmatmul.mubr.bf16.gmra.mrb[0].mxu0 %v602
  %v960 = vpop.f32.mrb[0].mxu0
  %v961 = vadd.f32 %v864, %v960
  %v962 = vpop.f32.mrb[0].mxu0
  %v963 = vpop.f32.mrb[0].mxu0
  %v964 = vadd.f32 %v867, %v963
  %v965 = vpop.f32.mrb[0].mxu0
  %966 = vmatprep.mubr.bf16.mxu0 0
  %967 = vmatmul.mubr.bf16.gmra.mrb[0].mxu0 %v605
  %v968 = vpop.f32.mrb[0].mxu0
  %v969 = vadd.f32 %v872, %v968
  %v970 = vpop.f32.mrb[0].mxu0
  %v971 = vpop.f32.mrb[0].mxu0
  %v972 = vadd.f32 %v875, %v971
  %v973 = vpop.f32.mrb[0].mxu0
  %974 = vmatprep.mubr.bf16.mxu0 0
  %975 = vmatmul.mubr.bf16.gmra.mrb[0].mxu0 %v608
  %v976 = vpop.f32.mrb[0].mxu0
  %v977 = vadd.f32 %v880, %v976
  %v978 = vpop.f32.mrb[0].mxu0
  %v979 = vpop.f32.mrb[0].mxu0
  %v980 = vadd.f32 %v883, %v979
  %v981 = vpop.f32.mrb[0].mxu0
  %982 = vmatprep.mubr.bf16.mxu0 0
  %983 = vmatmul.mubr.bf16.gmra.mrb[0].mxu0 %v611
  %v984 = vpop.f32.mrb[0].mxu0
  %v985 = vadd.f32 %v888, %v984
  %v986 = vpop.f32.mrb[0].mxu0
  %v987 = vpop.f32.mrb[0].mxu0
  %v988 = vadd.f32 %v891, %v987
  %v989 = vpop.f32.mrb[0].mxu0
  %990 = vmatprep.mubr.bf16.mxu0 0
  %991 = vmatmul.mubr.bf16.gmra.mrb[0].mxu0 %v614
  %v992 = vpop.f32.mrb[0].mxu0
  %v993 = vadd.f32 %v896, %v992
  %v994 = vpop.f32.mrb[0].mxu0
  %v995 = vpop.f32.mrb[0].mxu0
  %v996 = vadd.f32 %v899, %v995
  %v997 = vpop.f32.mrb[0].mxu0
  %998 = vmatprep.mubr.bf16.mxu0 0
  %999 = vmatmul.mubr.bf16.gmra.mrb[0].mxu0 %v617
  %v1000 = vpop.f32.mrb[0].mxu0
  %v1001 = vadd.f32 %v904, %v1000
  %v1002 = vpop.f32.mrb[0].mxu0
  %v1003 = vpop.f32.mrb[0].mxu0
  %v1004 = vadd.f32 %v907, %v1003
  %v1005 = vpop.f32.mrb[0].mxu0
  %1006 = vdwg.mxu0
  %v1007 = vmax.f32 %v945, 0.0
  %v1008 = vmax.f32 %v948, 0.0
  %v1009 = vmax.f32 %v953, 0.0
  %v1010 = vmax.f32 %v956, 0.0
  %v1011 = vmax.f32 %v961, 0.0
  %v1012 = vmax.f32 %v964, 0.0
  %v1013 = vmax.f32 %v969, 0.0
  %v1014 = vmax.f32 %v972, 0.0
  %v1015 = vmax.f32 %v977, 0.0
  %v1016 = vmax.f32 %v980, 0.0
  %v1017 = vmax.f32 %v985, 0.0
  %v1018 = vmax.f32 %v988, 0.0
  %v1019 = vmax.f32 %v993, 0.0
  %v1020 = vmax.f32 %v996, 0.0
  %v1021 = vmax.f32 %v1001, 0.0
  %v1022 = vmax.f32 %v1004, 0.0
  %v1023 = vpack.c.bf16 %v1008, %v1007
  %v1024 = vpack.c.bf16 %v1010, %v1009
  %v1025 = vpack.c.bf16 %v1012, %v1011
  %v1026 = vpack.c.bf16 %v1014, %v1013
  %v1027 = vpack.c.bf16 %v1016, %v1015
  %v1028 = vpack.c.bf16 %v1018, %v1017
  %v1029 = vpack.c.bf16 %v1020, %v1019
  %v1030 = vpack.c.bf16 %v1022, %v1021
  %v1031 = vld [vmem:[%s3] sm:$0xf]
  %v1032 = vld [vmem:[%s3 + $0x4] sm:$0xf]
  %v1033 = vld [vmem:[%s3 + $0x8] sm:$0xf]
  %v1034 = vld [vmem:[%s3 + $0xc] sm:$0xf]
  %v1035 = vld [vmem:[%s3 + $0x10] sm:$0xf]
  %v1036 = vld [vmem:[%s3 + $0x14] sm:$0xf]
  %v1037 = vld [vmem:[%s3 + $0x18] sm:$0xf]
  %v1038 = vld [vmem:[%s3 + $0x1c] sm:$0xf]
  %v1039 = vld [vmem:[%s3 + $0x20] sm:$0xf]
  %v1040 = vld [vmem:[%s3 + $0x24] sm:$0xf]
  %v1041 = vld [vmem:[%s3 + $0x28] sm:$0xf]
  %v1042 = vld [vmem:[%s3 + $0x2c] sm:$0xf]
  %v1043 = vld [vmem:[%s3 + $0x30] sm:$0xf]
  %v1044 = vld [vmem:[%s3 + $0x34] sm:$0xf]
  %v1045 = vld [vmem:[%s3 + $0x38] sm:$0xf]
  %v1046 = vld [vmem:[%s3 + $0x3c] sm:$0xf]
  %v1047 = vld [vmem:[%s4] sm:$0x1]
  %v1049 = vlaneseq
  %v1050 = vshrl.u32 %v1049, 7
  %v1051 = vsub.s32 0, %v1050
  %v1052 = vrot.slane %v1047, %v1051
  %v1070 = vunpack.c.l.b16 %v1031
  %v1071 = vunpack.c.l.b16 %v1032
  %v1072 = vunpack.c.l.b16 %v1033
  %v1073 = vunpack.c.l.b16 %v1034
  %v1074 = vunpack.c.l.b16 %v1035
  %v1075 = vunpack.c.l.b16 %v1036
  %v1076 = vunpack.c.l.b16 %v1037
  %v1077 = vunpack.c.l.b16 %v1038
  %v1078 = vunpack.c.l.b16 %v1039
  %v1079 = vunpack.c.l.b16 %v1040
  %v1080 = vunpack.c.l.b16 %v1041
  %v1081 = vunpack.c.l.b16 %v1042
  %v1082 = vunpack.c.l.b16 %v1043
  %v1083 = vunpack.c.l.b16 %v1044
  %v1084 = vunpack.c.l.b16 %v1045
  %v1085 = vunpack.c.l.b16 %v1046
  %v1086 = vpack.c.b16 %v1071, %v1070
  %v1087 = vpack.c.b16 %v1073, %v1072
  %v1088 = vpack.c.b16 %v1075, %v1074
  %v1089 = vpack.c.b16 %v1077, %v1076
  %v1090 = vpack.c.b16 %v1079, %v1078
  %v1091 = vpack.c.b16 %v1081, %v1080
  %v1092 = vpack.c.b16 %v1083, %v1082
  %v1093 = vpack.c.b16 %v1085, %v1084
  %1102 = vmatprep.subr.bf16.mxu0 0
  %1103 = vmatpush1.bf16.msra.mxu0 %v1086
  %1104 = vmatprep.subr.bf16.mxu0 0
  %1105 = vmatpush1.bf16.msra.mxu0 %v1087
  %1106 = vmatprep.subr.bf16.mxu0 0
  %1107 = vmatpush1.bf16.msra.mxu0 %v1088
  %1108 = vmatprep.subr.bf16.mxu0 0
  %1109 = vmatpush1.bf16.msra.mxu0 %v1089
  %1110 = vmatprep.subr.bf16.mxu0 0
  %1111 = vmatpush1.bf16.msra.mxu0 %v1090
  %1112 = vmatprep.subr.bf16.mxu0 0
  %1113 = vmatpush1.bf16.msra.mxu0 %v1091
  %1114 = vmatprep.subr.bf16.mxu0 0
  %1115 = vmatpush1.bf16.msra.mxu0 %v1092
  %1116 = vmatprep.subr.bf16.mxu0 0
  %1117 = vmatpush1.bf16.msra.mxu0 %v1093
  %1118 = vmatprep.subr.bf16.mxu0 0
  %1119 = vmatpush1.bf16.msra.mxu0 0
  %1120 = vmatprep.subr.bf16.mxu0 0
  %1121 = vmatpush1.bf16.msra.mxu0 0
  %1122 = vmatprep.subr.bf16.mxu0 0
  %1123 = vmatpush1.bf16.msra.mxu0 0
  %1124 = vmatprep.subr.bf16.mxu0 0
  %1125 = vmatpush1.bf16.msra.mxu0 0
  %1126 = vmatprep.subr.bf16.mxu0 0
  %1127 = vmatpush1.bf16.msra.mxu0 0
  %1128 = vmatprep.subr.bf16.mxu0 0
  %1129 = vmatpush1.bf16.msra.mxu0 0
  %1130 = vmatprep.subr.bf16.mxu0 0
  %1131 = vmatpush1.bf16.msra.mxu0 0
  %1132 = vmatprep.subr.bf16.mxu0 0
  %1133 = vmatpush1.bf16.msra.mxu0 0
  %1134 = vmatprep.mubr.bf16.mxu0 0
  %1135 = vmatmul.mubr.bf16.gmra.mrb[0].mxu0 %v1023
  %v1136 = vpop.f32.mrb[0].mxu0
  %v1137 = vadd.f32 %v1052, %v1136
  %v1138 = vpop.f32.mrb[0].mxu0
  %v1139 = vpop.f32.mrb[0].mxu0
  %v1140 = vadd.f32 %v1052, %v1139
  %v1141 = vpop.f32.mrb[0].mxu0
  %1142 = vmatprep.mubr.bf16.mxu0 0
  %1143 = vmatmul.mubr.bf16.gmra.mrb[0].mxu0 %v1024
  %v1144 = vpop.f32.mrb[0].mxu0
  %v1145 = vadd.f32 %v1052, %v1144
  %v1146 = vpop.f32.mrb[0].mxu0
  %v1147 = vpop.f32.mrb[0].mxu0
  %v1148 = vadd.f32 %v1052, %v1147
  %v1149 = vpop.f32.mrb[0].mxu0
  %1150 = vmatprep.mubr.bf16.mxu0 0
  %1151 = vmatmul.mubr.bf16.gmra.mrb[0].mxu0 %v1025
  %v1152 = vpop.f32.mrb[0].mxu0
  %v1153 = vadd.f32 %v1052, %v1152
  %v1154 = vpop.f32.mrb[0].mxu0
  %v1155 = vpop.f32.mrb[0].mxu0
  %v1156 = vadd.f32 %v1052, %v1155
  %v1157 = vpop.f32.mrb[0].mxu0
  %1158 = vmatprep.mubr.bf16.mxu0 0
  %1159 = vmatmul.mubr.bf16.gmra.mrb[0].mxu0 %v1026
  %v1160 = vpop.f32.mrb[0].mxu0
  %v1161 = vadd.f32 %v1052, %v1160
  %v1162 = vpop.f32.mrb[0].mxu0
  %v1163 = vpop.f32.mrb[0].mxu0
  %v1164 = vadd.f32 %v1052, %v1163
  %v1165 = vpop.f32.mrb[0].mxu0
  %1166 = vmatprep.mubr.bf16.mxu0 0
  %1167 = vmatmul.mubr.bf16.gmra.mrb[0].mxu0 %v1027
  %v1168 = vpop.f32.mrb[0].mxu0
  %v1169 = vadd.f32 %v1052, %v1168
  %v1170 = vpop.f32.mrb[0].mxu0
  %v1171 = vpop.f32.mrb[0].mxu0
  %v1172 = vadd.f32 %v1052, %v1171
  %v1173 = vpop.f32.mrb[0].mxu0
  %1174 = vmatprep.mubr.bf16.mxu0 0
  %1175 = vmatmul.mubr.bf16.gmra.mrb[0].mxu0 %v1028
  %v1176 = vpop.f32.mrb[0].mxu0
  %v1177 = vadd.f32 %v1052, %v1176
  %v1178 = vpop.f32.mrb[0].mxu0
  %v1179 = vpop.f32.mrb[0].mxu0
  %v1180 = vadd.f32 %v1052, %v1179
  %v1181 = vpop.f32.mrb[0].mxu0
  %1182 = vmatprep.mubr.bf16.mxu0 0
  %1183 = vmatmul.mubr.bf16.gmra.mrb[0].mxu0 %v1029
  %v1184 = vpop.f32.mrb[0].mxu0
  %v1185 = vadd.f32 %v1052, %v1184
  %v1186 = vpop.f32.mrb[0].mxu0
  %v1187 = vpop.f32.mrb[0].mxu0
  %v1188 = vadd.f32 %v1052, %v1187
  %v1189 = vpop.f32.mrb[0].mxu0
  %1190 = vmatprep.mubr.bf16.mxu0 0
  %1191 = vmatmul.mubr.bf16.gmra.mrb[0].mxu0 %v1030
  %v1192 = vpop.f32.mrb[0].mxu0
  %v1193 = vadd.f32 %v1052, %v1192
  %v1194 = vpop.f32.mrb[0].mxu0
  %v1195 = vpop.f32.mrb[0].mxu0
  %v1196 = vadd.f32 %v1052, %v1195
  %v1197 = vpop.f32.mrb[0].mxu0
  %1198 = vdwg.mxu0
  %v1199 = vmax.f32 %v1137, 0.0
  %v1200 = vmax.f32 %v1140, 0.0
  %v1201 = vmax.f32 %v1145, 0.0
  %v1202 = vmax.f32 %v1148, 0.0
  %v1203 = vmax.f32 %v1153, 0.0
  %v1204 = vmax.f32 %v1156, 0.0
  %v1205 = vmax.f32 %v1161, 0.0
  %v1206 = vmax.f32 %v1164, 0.0
  %v1207 = vmax.f32 %v1169, 0.0
  %v1208 = vmax.f32 %v1172, 0.0
  %v1209 = vmax.f32 %v1177, 0.0
  %v1210 = vmax.f32 %v1180, 0.0
  %v1211 = vmax.f32 %v1185, 0.0
  %v1212 = vmax.f32 %v1188, 0.0
  %v1213 = vmax.f32 %v1193, 0.0
  %v1214 = vmax.f32 %v1196, 0.0
  %v1215 = vpack.c.bf16 %v1200, %v1199
  %v1216 = vpack.c.bf16 %v1202, %v1201
  %v1217 = vpack.c.bf16 %v1204, %v1203
  %v1218 = vpack.c.bf16 %v1206, %v1205
  %v1219 = vpack.c.bf16 %v1208, %v1207
  %v1220 = vpack.c.bf16 %v1210, %v1209
  %v1221 = vpack.c.bf16 %v1212, %v1211
  %v1222 = vpack.c.bf16 %v1214, %v1213
  %v1223 = vld [vmem:[%s5] sm:$0xf]
  %v1224 = vld [vmem:[%s5 + $0x4] sm:$0xf]
  %v1225 = vld [vmem:[%s5 + $0x8] sm:$0xf]
  %v1226 = vld [vmem:[%s5 + $0xc] sm:$0xf]
  %v1227 = vld [vmem:[%s5 + $0x10] sm:$0xf]
  %v1228 = vld [vmem:[%s5 + $0x14] sm:$0xf]
  %v1229 = vld [vmem:[%s5 + $0x18] sm:$0xf]
  %v1230 = vld [vmem:[%s5 + $0x1c] sm:$0xf]
  %v1231 = vld [vmem:[%s5 + $0x20] sm:$0xf]
  %v1232 = vld [vmem:[%s5 + $0x24] sm:$0xf]
  %v1233 = vld [vmem:[%s5 + $0x28] sm:$0xf]
  %v1234 = vld [vmem:[%s5 + $0x2c] sm:$0xf]
  %v1235 = vld [vmem:[%s5 + $0x30] sm:$0xf]
  %v1236 = vld [vmem:[%s5 + $0x34] sm:$0xf]
  %v1237 = vld [vmem:[%s5 + $0x38] sm:$0xf]
  %v1238 = vld [vmem:[%s5 + $0x3c] sm:$0xf]
  %v1239 = vld [vmem:[%s6] sm:$0x1]
  %v1241 = vlaneseq
  %v1242 = vshrl.u32 %v1241, 7
  %v1243 = vsub.s32 0, %v1242
  %v1244 = vrot.slane %v1239, %v1243
  %v1262 = vunpack.c.l.b16 %v1223
  %v1263 = vunpack.c.l.b16 %v1224
  %v1264 = vunpack.c.l.b16 %v1225
  %v1265 = vunpack.c.l.b16 %v1226
  %v1266 = vunpack.c.l.b16 %v1227
  %v1267 = vunpack.c.l.b16 %v1228
  %v1268 = vunpack.c.l.b16 %v1229
  %v1269 = vunpack.c.l.b16 %v1230
  %v1270 = vunpack.c.l.b16 %v1231
  %v1271 = vunpack.c.l.b16 %v1232
  %v1272 = vunpack.c.l.b16 %v1233
  %v1273 = vunpack.c.l.b16 %v1234
  %v1274 = vunpack.c.l.b16 %v1235
  %v1275 = vunpack.c.l.b16 %v1236
  %v1276 = vunpack.c.l.b16 %v1237
  %v1277 = vunpack.c.l.b16 %v1238
  %v1278 = vpack.c.b16 %v1263, %v1262
  %v1279 = vpack.c.b16 %v1265, %v1264
  %v1280 = vpack.c.b16 %v1267, %v1266
  %v1281 = vpack.c.b16 %v1269, %v1268
  %v1282 = vpack.c.b16 %v1271, %v1270
  %v1283 = vpack.c.b16 %v1273, %v1272
  %v1284 = vpack.c.b16 %v1275, %v1274
  %v1285 = vpack.c.b16 %v1277, %v1276
  %1294 = vmatprep.subr.bf16.mxu0 0
  %1295 = vmatpush1.bf16.msra.mxu0 %v1278
  %1296 = vmatprep.subr.bf16.mxu0 0
  %1297 = vmatpush1.bf16.msra.mxu0 %v1279
  %1298 = vmatprep.subr.bf16.mxu0 0
  %1299 = vmatpush1.bf16.msra.mxu0 %v1280
  %1300 = vmatprep.subr.bf16.mxu0 0
  %1301 = vmatpush1.bf16.msra.mxu0 %v1281
  %1302 = vmatprep.subr.bf16.mxu0 0
  %1303 = vmatpush1.bf16.msra.mxu0 %v1282
  %1304 = vmatprep.subr.bf16.mxu0 0
  %1305 = vmatpush1.bf16.msra.mxu0 %v1283
  %1306 = vmatprep.subr.bf16.mxu0 0
  %1307 = vmatpush1.bf16.msra.mxu0 %v1284
  %1308 = vmatprep.subr.bf16.mxu0 0
  %1309 = vmatpush1.bf16.msra.mxu0 %v1285
  %1310 = vmatprep.subr.bf16.mxu0 0
  %1311 = vmatpush1.bf16.msra.mxu0 0
  %1312 = vmatprep.subr.bf16.mxu0 0
  %1313 = vmatpush1.bf16.msra.mxu0 0
  %1314 = vmatprep.subr.bf16.mxu0 0
  %1315 = vmatpush1.bf16.msra.mxu0 0
  %1316 = vmatprep.subr.bf16.mxu0 0
  %1317 = vmatpush1.bf16.msra.mxu0 0
  %1318 = vmatprep.subr.bf16.mxu0 0
  %1319 = vmatpush1.bf16.msra.mxu0 0
  %1320 = vmatprep.subr.bf16.mxu0 0
  %1321 = vmatpush1.bf16.msra.mxu0 0
  %1322 = vmatprep.subr.bf16.mxu0 0
  %1323 = vmatpush1.bf16.msra.mxu0 0
  %1324 = vmatprep.subr.bf16.mxu0 0
  %1325 = vmatpush1.bf16.msra.mxu0 0
  %1326 = vmatprep.mubr.bf16.mxu0 0
  %1327 = vmatmul.mubr.bf16.gmra.mrb[0].mxu0 %v1215
  %v1328 = vpop.f32.mrb[0].mxu0
  %v1329 = vadd.f32 %v1244, %v1328
  %v1330 = vpop.f32.mrb[0].mxu0
  %v1331 = vpop.f32.mrb[0].mxu0
  %v1332 = vadd.f32 %v1244, %v1331
  %v1333 = vpop.f32.mrb[0].mxu0
  %1334 = vmatprep.mubr.bf16.mxu0 0
  %1335 = vmatmul.mubr.bf16.gmra.mrb[0].mxu0 %v1216
  %v1336 = vpop.f32.mrb[0].mxu0
  %v1337 = vadd.f32 %v1244, %v1336
  %v1338 = vpop.f32.mrb[0].mxu0
  %v1339 = vpop.f32.mrb[0].mxu0
  %v1340 = vadd.f32 %v1244, %v1339
  %v1341 = vpop.f32.mrb[0].mxu0
  %1342 = vmatprep.mubr.bf16.mxu0 0
  %1343 = vmatmul.mubr.bf16.gmra.mrb[0].mxu0 %v1217
  %v1344 = vpop.f32.mrb[0].mxu0
  %v1345 = vadd.f32 %v1244, %v1344
  %v1346 = vpop.f32.mrb[0].mxu0
  %v1347 = vpop.f32.mrb[0].mxu0
  %v1348 = vadd.f32 %v1244, %v1347
  %v1349 = vpop.f32.mrb[0].mxu0
  %1350 = vmatprep.mubr.bf16.mxu0 0
  %1351 = vmatmul.mubr.bf16.gmra.mrb[0].mxu0 %v1218
  %v1352 = vpop.f32.mrb[0].mxu0
  %v1353 = vadd.f32 %v1244, %v1352
  %v1354 = vpop.f32.mrb[0].mxu0
  %v1355 = vpop.f32.mrb[0].mxu0
  %v1356 = vadd.f32 %v1244, %v1355
  %v1357 = vpop.f32.mrb[0].mxu0
  %1358 = vmatprep.mubr.bf16.mxu0 0
  %1359 = vmatmul.mubr.bf16.gmra.mrb[0].mxu0 %v1219
  %v1360 = vpop.f32.mrb[0].mxu0
  %v1361 = vadd.f32 %v1244, %v1360
  %v1362 = vpop.f32.mrb[0].mxu0
  %v1363 = vpop.f32.mrb[0].mxu0
  %v1364 = vadd.f32 %v1244, %v1363
  %v1365 = vpop.f32.mrb[0].mxu0
  %1366 = vmatprep.mubr.bf16.mxu0 0
  %1367 = vmatmul.mubr.bf16.gmra.mrb[0].mxu0 %v1220
  %v1368 = vpop.f32.mrb[0].mxu0
  %v1369 = vadd.f32 %v1244, %v1368
  %v1370 = vpop.f32.mrb[0].mxu0
  %v1371 = vpop.f32.mrb[0].mxu0
  %v1372 = vadd.f32 %v1244, %v1371
  %v1373 = vpop.f32.mrb[0].mxu0
  %1374 = vmatprep.mubr.bf16.mxu0 0
  %1375 = vmatmul.mubr.bf16.gmra.mrb[0].mxu0 %v1221
  %v1376 = vpop.f32.mrb[0].mxu0
  %v1377 = vadd.f32 %v1244, %v1376
  %v1378 = vpop.f32.mrb[0].mxu0
  %v1379 = vpop.f32.mrb[0].mxu0
  %v1380 = vadd.f32 %v1244, %v1379
  %v1381 = vpop.f32.mrb[0].mxu0
  %1382 = vmatprep.mubr.bf16.mxu0 0
  %1383 = vmatmul.mubr.bf16.gmra.mrb[0].mxu0 %v1222
  %v1384 = vpop.f32.mrb[0].mxu0
  %v1385 = vadd.f32 %v1244, %v1384
  %v1386 = vpop.f32.mrb[0].mxu0
  %v1387 = vpop.f32.mrb[0].mxu0
  %v1388 = vadd.f32 %v1244, %v1387
  %v1389 = vpop.f32.mrb[0].mxu0
  %1390 = vdwg.mxu0
  %1391 = vst [vmem:[%s7] sm:$0xff] %v1329
  %1392 = vst [vmem:[%s7 + $0x8] sm:$0xff] %v1332
  %1393 = vst [vmem:[%s7 + $0x10] sm:$0xff] %v1337
  %1394 = vst [vmem:[%s7 + $0x18] sm:$0xff] %v1340
  %1395 = vst [vmem:[%s7 + $0x20] sm:$0xff] %v1345
  %1396 = vst [vmem:[%s7 + $0x28] sm:$0xff] %v1348
  %1397 = vst [vmem:[%s7 + $0x30] sm:$0xff] %v1353
  %1398 = vst [vmem:[%s7 + $0x38] sm:$0xff] %v1356
  %1399 = vst [vmem:[%s7 + $0x40] sm:$0xff] %v1361
  %1400 = vst [vmem:[%s7 + $0x48] sm:$0xff] %v1364
  %1401 = vst [vmem:[%s7 + $0x50] sm:$0xff] %v1369
  %1402 = vst [vmem:[%s7 + $0x58] sm:$0xff] %v1372
  %1403 = vst [vmem:[%s7 + $0x60] sm:$0xff] %v1377
  %1404 = vst [vmem:[%s7 + $0x68] sm:$0xff] %v1380
  %1405 = vst [vmem:[%s7 + $0x70] sm:$0xff] %v1385
  %1406 = vst [vmem:[%s7 + $0x78] sm:$0xff] %v1388
  // Predicated region
  $region30: #{nikola_nn_forward.1} parent=0 // pred_check
    _
  $region31: #{nikola_nn_forward.1} parent=0 // pred_check_branch
    %1408 = sbr.rel (0) target = $region33
  $region32: #{nikola_nn_forward.1} parent=0 // pred_region
    _
  $region33: #{nikola_nn_forward.1} parent=0 // pred_fallthru
    _
  // Predicated region
  $region34: #{nikola_nn_forward.1} parent=0 // pred_check
    _
  $region35: #{nikola_nn_forward.1} parent=0 // pred_check_branch
    %1410 = sbr.rel (0) target = $region37
  $region36: #{nikola_nn_forward.1} parent=0 // pred_region
    _
  $region37: #{nikola_nn_forward.1} parent=0 // pred_fallthru
    _

</llo_original>
